<compile_context>
chip_gen: v7x
topology: tpu7x:2x2x1
jax: 0.10.0
libtpu: 0.0.40
codegen_flags: <defaults>
</compile_context>

<pallas_src>
import functools

import jax
import jax.numpy as jnp
import numpy as np
from jax.experimental import pallas as pl
from jax.experimental.pallas import tpu as pltpu


# ----------------------------------------------------------------------------
# helpers
# ----------------------------------------------------------------------------
def _round_up(v, m):
    return ((v + m - 1) // m) * m


def _device_kind():
    try:
        return jax.devices()[0].device_kind.lower()
    except Exception:
        return ""


def _vmem_bytes(tq, tp, mp, buf_pts):
    """Conservative per-step VMEM footprint estimate (bytes)."""
    bf16, f32 = 2, 4
    tiles = buf_pts * (tq * tp * bf16 + tp * mp * bf16)            # pipelined point tiles
    resident = 2 * (tq * mp * f32 + mp * f32) + 2 * tq * mp * f32  # ccls + tsum + output (dbl-buffered)
    scratch = (2 * tq * mp + tq) * f32
    temps = 6 * tq * tp * f32                                      # elementwise temps + stacked-LHS copy
    return tiles + resident + scratch + temps


# ----------------------------------------------------------------------------
# Pallas kernel: per-image cost matrix  C = w_mask*BCE + w_class*(-prob) + w_dice*dice
# Grid: (B, NQ, NP).  Accumulate over point tiles, finalize on the last tile.
# ----------------------------------------------------------------------------
def _cost_kernel(ccls_ref, tsum_ref, outm_ref, tgtm_ref, c_ref,
                 acc_ref, negsum_ref,
                 *, w_mask, w_dice, inv_points, use_bf16):
    pk = pl.program_id(2)

    @pl.when(pk == 0)
    def _init():
        acc_ref[...] = jnp.zeros_like(acc_ref)
        negsum_ref[...] = jnp.zeros_like(negsum_ref)

    x_bf = outm_ref[0]                      # (TQ, TP) bf16 predicted mask logits at points
    t_bf = tgtm_ref[0]                      # (TP, Mp) bf16 targets at points; last col = ones

    # elementwise softplus/sigmoid: bf16 on v6e/v7x (native VPU/EUP), f32 on v5e
    x = x_bf if use_bf16 else x_bf.astype(jnp.float32)
    one = jnp.asarray(1.0, dtype=x.dtype)
    zero = jnp.asarray(0.0, dtype=x.dtype)

    ex = jnp.exp(-jnp.abs(x))
    neg = jnp.maximum(x, zero) + jnp.log1p(ex)              # softplus(x) == BCE(x, target=0)
    if use_bf16:
        s = jnp.where(x >= zero, one, ex) / (one + ex)      # sigmoid(x)
    else:
        s = jnp.where(x >= zero, one, ex) * pl.reciprocal(one + ex, approx=True)

    # (Q,1) reduction accumulated in f32
    negsum_ref[...] += jnp.sum(neg, axis=-1, keepdims=True, dtype=jnp.float32)

    # one MXU pass with shared RHS:  [x ; sigmoid(x)] @ t  -> rows [:TQ]=x@t, rows [TQ:]=sigmoid@t
    lhs = jnp.concatenate([x_bf, s.astype(jnp.bfloat16)], axis=0)        # (2*TQ, TP)
    acc_ref[...] += jnp.dot(lhs, t_bf, preferred_element_type=jnp.float32)

    @pl.when(pk == pl.num_programs(2) - 1)
    def _finalize():
        tq = c_ref.shape[1]
        mp = c_ref.shape[2]
        acc = acc_ref[...]
        xt = acc[:tq, :]                                     # x @ t
        dice_num = acc[tq:, :]                               # sigmoid(x) @ t ; last col == sum_p sigmoid(x)
        ssum = dice_num[:, mp - 1:mp]                        # (TQ, 1) folded via the ones column

        # fused sigmoid-BCE:  pos@t + neg@(1-t) == rowsum(softplus(x)) - x@t
        cost_mask = (negsum_ref[...] - xt) * inv_points
        denom = ssum + tsum_ref[0] + 1.0
        cost_dice = 1.0 - (2.0 * dice_num + 1.0) * pl.reciprocal(denom, approx=True)
        c_ref[0] = (w_mask * cost_mask + ccls_ref[0] + w_dice * cost_dice).astype(c_ref.dtype)


def compute_cost_matrices(cost_class, tsum, out_pts, tgt_pts_t, *,
                          w_class, w_mask, w_dice, tile_points=None):
    """cost_class (B,Q,Mp) f32 = -softmax(logits)@onehot ; tsum (B,1,Mp) f32 ;
    out_pts (B,Q,P) bf16 ; tgt_pts_t (B,P,Mp) bf16.  The LAST target column must be padding
    (it is overwritten with ones in-wrapper).  Returns C (B, Q, Mp) f32."""
    B, Q, Mp = cost_class.shape
    P = out_pts.shape[2]
    assert Mp % 128 == 0

    dk = _device_kind()
    use_bf16 = ("v6" in dk) or ("v7" in dk)          # v5e has no native bf16 VPU/EUP path
    is_v5e = ("v5e" in dk) or ("v5 lite" in dk)
    buf_pts = 3 if is_v5e else 2                     # deeper point-tile pipeline on mem-bound v5e
    vmem_budget = (48 << 20) if "v7" in dk else (64 << 20)   # v7x: 64 MiB physical VMEM

    # --- Q padded to a multiple of 32 -> two parallel TQ blocks (keeps both v7x TCs busy at B=1,
    #     keeps the bf16 stacked-LHS sublane boundary (16 rows) aligned)
    Qp = _round_up(Q, 32)
    TQ = Qp // 2
    NQ = 2

    # --- point tile: biggest multiple of 128 fitting the VMEM budget (TP need not divide P);
    #     then shrink to the padding-minimizing size for the resulting step count
    tp_cap = _round_up(P, 128)
    if tile_points is not None:
        tp_cap = max(128, min(tp_cap, _round_up(int(tile_points), 128)))
    TP = tp_cap
    while TP > 128 and _vmem_bytes(TQ, TP, Mp, buf_pts) > vmem_budget:
        TP -= 128
    NP = -(-P // TP)
    TP = _round_up(-(-P // NP), 128)
    Pp = NP * TP

    # --- host-side padding / layout fixups (cheap batched XLA ops)
    out_p = out_pts
    if Qp > Q:
        out_p = jnp.pad(out_p, ((0, 0), (0, Qp - Q), (0, 0)))
    if Pp > P:
        # neutral point padding: softplus(-30000)=0, sigmoid(-30000)=0, x*(t=0)=0
        out_p = jnp.pad(out_p, ((0, 0), (0, 0), (0, Pp - P)), constant_values=-30000.0)
    # last (guaranteed-padding) target column becomes an all-ones "point counter": the dice matmul
    # then also produces sum_p sigmoid(x) for free (folds the ssum reduce onto the MXU).
    tgt_p = tgt_pts_t.at[:, :, Mp - 1].set(1.0)
    if Pp > P:
        tgt_p = jnp.pad(tgt_p, ((0, 0), (0, Pp - P), (0, 0)))
    ccls = (w_class * cost_class).astype(jnp.float32)
    if Qp > Q:
        ccls = jnp.pad(ccls, ((0, 0), (0, Qp - Q), (0, 0)))
    tsum = tsum.astype(jnp.float32)

    def _run(elementwise_bf16, deep_buffer):
        kernel = functools.partial(
            _cost_kernel, w_mask=float(w_mask), w_dice=float(w_dice),
            inv_points=1.0 / float(P), use_bf16=elementwise_bf16)
        if deep_buffer:
            spec_out_pts = pl.BlockSpec((1, TQ, TP), lambda b, q, k: (b, q, k),
                                        pipeline_mode=pl.Buffered(3))
            spec_tgt = pl.BlockSpec((1, TP, Mp), lambda b, q, k: (b, k, 0),
                                    pipeline_mode=pl.Buffered(3))
        else:
            spec_out_pts = pl.BlockSpec((1, TQ, TP), lambda b, q, k: (b, q, k))
            spec_tgt = pl.BlockSpec((1, TP, Mp), lambda b, q, k: (b, k, 0))
        out = pl.pallas_call(
            kernel,
            out_shape=jax.ShapeDtypeStruct((B, Qp, Mp), jnp.float32),
            grid=(B, NQ, NP),
            in_specs=[
                pl.BlockSpec((1, TQ, Mp), lambda b, q, k: (b, q, 0)),   # w_class * cost_class
                pl.BlockSpec((1, 1, Mp), lambda b, q, k: (b, 0, 0)),    # sum_p target mask
                spec_out_pts,                                           # predicted-mask point tile
                spec_tgt,                                               # target-mask point tile (+ones col)
            ],
            out_specs=pl.BlockSpec((1, TQ, Mp), lambda b, q, k: (b, q, 0)),
            scratch_shapes=[
                pltpu.VMEM((2 * TQ, Mp), jnp.float32),   # stacked [x@t ; sigmoid(x)@t] accumulator
                pltpu.VMEM((TQ, 1), jnp.float32),        # sum_p softplus(x)
            ],
            compiler_params=pltpu.CompilerParams(
                dimension_semantics=("parallel", "parallel", "arbitrary"),
                vmem_limit_bytes=int(vmem_budget)),
        )(ccls, tsum, out_p, tgt_p)
        return jax.block_until_ready(out)

    # per-chip feature ladder with a conservative (known-good) f32 / 2-deep fallback
    configs = [(use_bf16, is_v5e)]
    if use_bf16 or is_v5e:
        configs.append((False, False))
    err, C = None, None
    for eb, db in configs:
        try:
            C = _run(eb, db)
            err = None
            break
        except Exception as e:     # pragma: no cover - fallback if a chip rejects bf16/Buffered path
            err = e
    if err is not None:
        raise err
    return C[:, :Q, :]


# ----------------------------------------------------------------------------
# Plain-JAX glue: point_sample == F.grid_sample(bilinear, align_corners=False, zero padding)
# ----------------------------------------------------------------------------
def point_sample(masks, coords):
    """masks (N, H, W); coords (P, 2) in [0,1], (x, y) order.  Returns (N, P)."""
    N, H, W = masks.shape
    x = coords[:, 0] * W - 0.5
    y = coords[:, 1] * H - 0.5
    x0 = jnp.floor(x)
    y0 = jnp.floor(y)

    def gather(yi, xi):
        valid = (xi >= 0) & (xi <= W - 1) & (yi >= 0) & (yi <= H - 1)
        xi_c = jnp.clip(xi, 0, W - 1).astype(jnp.int32)
        yi_c = jnp.clip(yi, 0, H - 1).astype(jnp.int32)
        vals = masks[:, yi_c, xi_c]                       # (N, P)
        return jnp.where(valid[None, :], vals, 0.0)

    wx1 = x - x0
    wx0 = 1.0 - wx1
    wy1 = y - y0
    wy0 = 1.0 - wy1
    return (gather(y0, x0) * (wy0 * wx0)[None, :]
            + gather(y0, x0 + 1) * (wy0 * wx1)[None, :]
            + gather(y0 + 1, x0) * (wy1 * wx0)[None, :]
            + gather(y0 + 1, x0 + 1) * (wy1 * wx1)[None, :])


def _linear_sum_assignment(cost):
    try:
        from scipy.optimize import linear_sum_assignment
        return linear_sum_assignment(cost)
    except ImportError:
        # TODO(synk): Hungarian algorithm is a host-side sequential algorithm with no Pallas
        # equivalent; greedy fallback if scipy is missing (not an optimal assignment).
        c = cost.copy()
        rows, cols = [], []
        for _ in range(min(c.shape)):
            r, col = np.unravel_index(np.argmin(c), c.shape)
            rows.append(r)
            cols.append(col)
            c[r, :] = np.inf
            c[:, col] = np.inf
        order = np.argsort(rows)
        return np.asarray(rows)[order], np.asarray(cols)[order]


class HungarianMatcher:
    def __init__(self, cost_class=1, cost_mask=1, cost_dice=1, num_points=0, tile_points=None):
        assert cost_class != 0 or cost_mask != 0 or cost_dice != 0, "all costs cant be 0"
        self.cost_class = cost_class
        self.cost_mask = cost_mask
        self.cost_dice = cost_dice
        self.num_points = num_points
        self.tile_points = tile_points

    def prepare(self, outputs, targets, rng):
        """Point-sample masks (batched where possible), one-hot labels, pad M so the last column
        is always padding, and pre-transpose per-target operands to the kernel's lane-dense layout."""
        pred_logits = outputs["pred_logits"]
        pred_masks = outputs["pred_masks"]
        B, Q, C1 = pred_logits.shape
        num_tgts = [int(t["labels"].shape[0]) for t in targets]
        # +1 guarantees the last target column is padding (it carries the in-kernel ones column)
        Mp = _round_up(max(max(num_tgts), 1) + 1, 128)

        rng, sub = jax.random.split(rng)
        coords = jax.random.uniform(sub, (B, self.num_points, 2), dtype=jnp.float32)

        # predicted-mask point sampling: one batched (vmapped) gather for the whole batch
        out_pts = jax.vmap(point_sample)(pred_masks.astype(jnp.float32),
                                         coords).astype(jnp.bfloat16)            # (B, Q, P)

        # classification affinity: batched softmax + one-hot einsum (padded labels -> zero rows)
        labels_pad = np.full((B, Mp), -1, np.int32)
        for b in range(B):
            labels_pad[b, :num_tgts[b]] = np.asarray(targets[b]["labels"], np.int32)
        onehot = jax.nn.one_hot(jnp.asarray(labels_pad), C1, dtype=jnp.float32)  # (B, Mp, C1)
        prob = jax.nn.softmax(pred_logits.astype(jnp.float32), axis=-1)
        cost_class = -jnp.einsum("bqc,bmc->bqm", prob, onehot)                   # (B, Q, Mp)

        # target-mask point sampling: per-image (M / resolution may vary), padded and stacked,
        # then one batched transpose to the kernel's (P, Mp) lane-dense layout.
        tgt_rows = []
        for b in range(B):
            t = point_sample(targets[b]["masks"].astype(jnp.float32), coords[b])  # (M, P)
            tgt_rows.append(jnp.pad(t, ((0, Mp - num_tgts[b]), (0, 0))))
        tgt_bf = jnp.stack(tgt_rows).astype(jnp.bfloat16)                          # (B, Mp, P)
        tsum = jnp.transpose(jnp.sum(tgt_bf.astype(jnp.float32), axis=-1, keepdims=True),
                             (0, 2, 1))                                            # (B, 1, Mp)
        tgt_pts_t = jnp.transpose(tgt_bf, (0, 2, 1))                               # (B, P, Mp)

        return cost_class, tsum, out_pts, tgt_pts_t, num_tgts

    def forward(self, outputs, targets, rng):
        cost_class, tsum, out_pts, tgt_pts_t, num_tgts = self.prepare(outputs, targets, rng)
        C = compute_cost_matrices(cost_class, tsum, out_pts, tgt_pts_t,
                                  w_class=self.cost_class, w_mask=self.cost_mask,
                                  w_dice=self.cost_dice, tile_points=self.tile_points)
        C = jax.block_until_ready(C)
        C_np = np.asarray(C)
        indices = []
        for b in range(C_np.shape[0]):
            i, j = _linear_sum_assignment(C_np[b, :, :num_tgts[b]])   # drop padded target columns
            indices.append((np.asarray(i, np.int64), np.asarray(j, np.int64)))
        return indices, C


# ----------------------------------------------------------------------------
# Pure-numpy reference (f64) for correctness check of the kernel math.
# ----------------------------------------------------------------------------
def _reference_cost(cost_class, x, t, w_class, w_mask, w_dice):
    x = np.asarray(x, np.float64)
    t = np.asarray(t, np.float64)
    P = x.shape[-1]
    pos = np.maximum(-x, 0) + np.log1p(np.exp(-np.abs(x)))
    neg = np.maximum(x, 0) + np.log1p(np.exp(-np.abs(x)))
    cost_mask = (np.einsum("bqp,bmp->bqm", pos, t)
                 + np.einsum("bqp,bmp->bqm", neg, 1 - t)) / P
    s = 1.0 / (1.0 + np.exp(-x))
    num = 2 * np.einsum("bqp,bmp->bqm", s, t)
    den = s.sum(-1)[:, :, None] + t.sum(-1)[:, None, :]
    cost_dice = 1 - (num + 1) / (den + 1)
    return (w_mask * cost_mask + w_class * np.asarray(cost_class, np.float64)
            + w_dice * cost_dice)


if __name__ == "__main__":
    key = jax.random.PRNGKey(0)
    B, Q, NUM_CLASSES = 2, 8, 4
    C1 = NUM_CLASSES + 1          # pred_logits includes the "no object" class
    H = W = 16                    # predicted mask resolution
    HT = WT = 32                  # target mask resolution
    M = 8                         # targets per image (fixed for this synthetic batch)
    P = 500                       # num_points; NOT a multiple of 128 -> exercises the point padding path

    k1, k2, k3, k4, k5 = jax.random.split(key, 5)
    pred_logits = jax.random.normal(k1, (B, Q, C1), dtype=jnp.float32)
    pred_masks = jax.random.normal(k2, (B, Q, H, W), dtype=jnp.float32)
    labels = jax.random.randint(k3, (B, M), 0, NUM_CLASSES)
    tgt_masks = (jax.random.uniform(k4, (B, M, HT, WT)) > 0.5).astype(jnp.float32)

    outputs = {"pred_logits": pred_logits, "pred_masks": pred_masks}
    targets = [{"labels": labels[b], "masks": tgt_masks[b]} for b in range(B)]

    matcher = HungarianMatcher(cost_class=1, cost_mask=1, cost_dice=1,
                               num_points=P, tile_points=256)

    # run the Pallas kernel + host-side assignment
    indices, C = matcher.forward(outputs, targets, rng=k5)
    C = jax.block_until_ready(C)

    # verify kernel output against a pure-numpy f64 reference on the same bf16-quantized samples
    cost_class, tsum, out_pts, tgt_pts_t, num_tgts = matcher.prepare(outputs, targets, rng=k5)
    x_np = np.asarray(out_pts.astype(jnp.float32), np.float64)                              # (B,Q,P)
    t_np = np.asarray(tgt_pts_t.astype(jnp.float32), np.float64).transpose(0, 2, 1)[:, :M]  # (B,M,P)
    cls_np = np.asarray(cost_class, np.float64)[:, :, :M]                                   # (B,Q,M)
    C_ref = _reference_cost(cls_np, x_np, t_np, 1.0, 1.0, 1.0)
    # tolerance accommodates approx reciprocals and the (optional) bf16 elementwise path
    np.testing.assert_allclose(np.asarray(C)[:, :, :M], C_ref, rtol=2e-2, atol=2e-2)

    assert C.shape == (B, Q, 128)
    assert len(indices) == B
    for i, j in indices:
        assert i.shape == j.shape == (min(Q, M),)

    print("KERNEL_OK")
</pallas_src>

<mosaic_0001>
module attributes {stable_mosaic.version = 11 : i64} {
  func.func @_cost_kernel(%arg0: i32, %arg1: i32, %arg2: i32, %arg3: memref<1x16x128xf32, #tpu.memory_space<vmem>>, %arg4: memref<1x1x128xf32, #tpu.memory_space<vmem>>, %arg5: memref<1x16x256xbf16, #tpu.memory_space<vmem>>, %arg6: memref<1x256x128xbf16, #tpu.memory_space<vmem>>, %arg7: memref<1x16x128xf32, #tpu.memory_space<vmem>>, %arg8: memref<32x128xf32, #tpu.memory_space<vmem>>, %arg9: memref<16x1xf32, #tpu.memory_space<vmem>>) attributes {dimension_semantics = [#tpu.dimension_semantics<parallel>, #tpu.dimension_semantics<parallel>, #tpu.dimension_semantics<arbitrary>], iteration_bounds = array<i64: 2, 2, 2>, scalar_prefetch = 0 : i64, scratch_operands = 2 : i64, tpu.core_type = #tpu.core_type<tc>, window_params = [{transform_indices = @transform_0, window_bounds = array<i64: 1, 16, 128>}, {transform_indices = @transform_1, window_bounds = array<i64: 1, 1, 128>}, {transform_indices = @transform_2, window_bounds = array<i64: 1, 16, 256>}, {transform_indices = @transform_3, window_bounds = array<i64: 1, 256, 128>}, {transform_indices = @transform_4, window_bounds = array<i64: 1, 16, 128>}]} {
    %c0_i32 = arith.constant 0 : i32
    %0 = arith.cmpi eq, %arg2, %c0_i32 : i32
    %1 = arith.extui %0 : i1 to i32
    %c0_i32_0 = arith.constant 0 : i32
    %2 = arith.cmpi ne, %1, %c0_i32_0 : i32
    scf.if %2 {
      %cst_21 = arith.constant 0.000000e+00 : f32
      %38 = vector.broadcast %cst_21 : f32 to vector<32x128xf32>
      %c0_22 = arith.constant 0 : index
      %c0_23 = arith.constant 0 : index
      %39 = vector.load %arg8[%c0_22, %c0_23] : memref<32x128xf32, #tpu.memory_space<vmem>>, vector<32x128xf32>
      tpu.vector_store %arg8[%c0_22, %c0_23], %38 {strides = array<i32>} : memref<32x128xf32, #tpu.memory_space<vmem>>, vector<32x128xf32>,
      %cst_24 = arith.constant 0.000000e+00 : f32
      %40 = vector.broadcast %cst_24 : f32 to vector<16x1xf32>
      %c0_25 = arith.constant 0 : index
      %c0_26 = arith.constant 0 : index
      %41 = vector.load %arg9[%c0_25, %c0_26] : memref<16x1xf32, #tpu.memory_space<vmem>>, vector<16x1xf32>
      tpu.vector_store %arg9[%c0_25, %c0_26], %40 {strides = array<i32>} : memref<16x1xf32, #tpu.memory_space<vmem>>, vector<16x1xf32>,
    } else {
    }
    %c0 = arith.constant 0 : index
    %c0_1 = arith.constant 0 : index
    %c0_2 = arith.constant 0 : index
    %3 = vector.load %arg5[%c0, %c0_1, %c0_2] : memref<1x16x256xbf16, #tpu.memory_space<vmem>>, vector<1x16x256xbf16>
    %4 = vector.shape_cast %3 : vector<1x16x256xbf16> to vector<16x256xbf16>
    %c0_3 = arith.constant 0 : index
    %c0_4 = arith.constant 0 : index
    %c0_5 = arith.constant 0 : index
    %5 = vector.load %arg6[%c0_3, %c0_4, %c0_5] : memref<1x256x128xbf16, #tpu.memory_space<vmem>>, vector<1x256x128xbf16>
    %6 = vector.shape_cast %5 : vector<1x256x128xbf16> to vector<256x128xbf16>
    %7 = arith.extf %4 : vector<16x256xbf16> to vector<16x256xf32>
    %8 = math.absf %7 : vector<16x256xf32>
    %cst = arith.constant 0.000000e+00 : f32
    %9 = vector.broadcast %cst : f32 to vector<16x256xf32>
    %10 = arith.subf %9, %8 : vector<16x256xf32>
    %11 = math.exp %10 : vector<16x256xf32>
    %cst_6 = arith.constant 0.000000e+00 : f32
    %12 = vector.broadcast %cst_6 : f32 to vector<16x256xf32>
    %13 = arith.maximumf %7, %12 : vector<16x256xf32>
    %14 = math.log1p %11 : vector<16x256xf32>
    %15 = arith.addf %13, %14 : vector<16x256xf32>
    %cst_7 = arith.constant 0.000000e+00 : f32
    %16 = vector.broadcast %cst_7 : f32 to vector<16x256xf32>
    %17 = arith.cmpf oge, %7, %16 : vector<16x256xf32>
    %cst_8 = arith.constant 1.000000e+00 : f32
    %18 = vector.broadcast %cst_8 : f32 to vector<16x256xf32>
    %19 = arith.select %17, %18, %11 : vector<16x256xi1>, vector<16x256xf32>
    %cst_9 = arith.constant 1.000000e+00 : f32
    %20 = vector.broadcast %cst_9 : f32 to vector<16x256xf32>
    %21 = arith.addf %20, %11 : vector<16x256xf32>
    %22 = tpu.reciprocal %21 {approx = true} : vector<16x256xf32> -> vector<16x256xf32>
    %23 = arith.mulf %19, %22 : vector<16x256xf32>
    %c0_10 = arith.constant 0 : index
    %c0_11 = arith.constant 0 : index
    %24 = vector.load %arg9[%c0_10, %c0_11] : memref<16x1xf32, #tpu.memory_space<vmem>>, vector<16x1xf32>
    %cst_12 = arith.constant dense<0.000000e+00> : vector<16xf32>
    %25 = vector.multi_reduction <add>, %15, %cst_12 [1] : vector<16x256xf32> to vector<16xf32>
    %26 = vector.shape_cast %25 : vector<16xf32> to vector<16x1xf32>
    %27 = arith.addf %24, %26 : vector<16x1xf32>
    %c0_13 = arith.constant 0 : index
    %c0_14 = arith.constant 0 : index
    %28 = vector.load %arg9[%c0_13, %c0_14] : memref<16x1xf32, #tpu.memory_space<vmem>>, vector<16x1xf32>
    tpu.vector_store %arg9[%c0_13, %c0_14], %27 {strides = array<i32>} : memref<16x1xf32, #tpu.memory_space<vmem>>, vector<16x1xf32>,
    %29 = arith.truncf %23 : vector<16x256xf32> to vector<16x256xbf16>
    %30 = tpu.concatenate %4, %29 in 0 : vector<16x256xbf16>, vector<16x256xbf16> -> vector<32x256xbf16>
    %c0_15 = arith.constant 0 : index
    %c0_16 = arith.constant 0 : index
    %31 = vector.load %arg8[%c0_15, %c0_16] : memref<32x128xf32, #tpu.memory_space<vmem>>, vector<32x128xf32>
    %cst_17 = arith.constant dense<0.000000e+00> : vector<32x128xf32>
    %32 = tpu.matmul %30, %6, %cst_17 {dimension_numbers = #tpu.dot_dimension_numbers<[1], [0], [0], [1], [0, 0, 1, 1], [], []>} : vector<32x256xbf16>, vector<256x128xbf16>, vector<32x128xf32> -> vector<32x128xf32>
    %33 = arith.addf %31, %32 : vector<32x128xf32>
    %c0_18 = arith.constant 0 : index
    %c0_19 = arith.constant 0 : index
    %34 = vector.load %arg8[%c0_18, %c0_19] : memref<32x128xf32, #tpu.memory_space<vmem>>, vector<32x128xf32>
    tpu.vector_store %arg8[%c0_18, %c0_19], %33 {strides = array<i32>} : memref<32x128xf32, #tpu.memory_space<vmem>>, vector<32x128xf32>,
    %c1_i32 = arith.constant 1 : i32
    %35 = arith.cmpi eq, %arg2, %c1_i32 : i32
    %36 = arith.extui %35 : i1 to i32
    %c0_i32_20 = arith.constant 0 : i32
    %37 = arith.cmpi ne, %36, %c0_i32_20 : i32
    scf.if %37 {
      %c0_21 = arith.constant 0 : index
      %c0_22 = arith.constant 0 : index
      %38 = vector.load %arg8[%c0_21, %c0_22] : memref<32x128xf32, #tpu.memory_space<vmem>>, vector<32x128xf32>
      %39 = vector.extract_strided_slice %38 {offsets = [0, 0], sizes = [16, 128], strides = [1, 1]} : vector<32x128xf32> to vector<16x128xf32>
      %40 = vector.extract_strided_slice %38 {offsets = [16, 0], sizes = [16, 128], strides = [1, 1]} : vector<32x128xf32> to vector<16x128xf32>
      %41 = vector.extract_strided_slice %40 {offsets = [0, 127], sizes = [16, 1], strides = [1, 1]} : vector<16x128xf32> to vector<16x1xf32>
      %c0_23 = arith.constant 0 : index
      %c0_24 = arith.constant 0 : index
      %42 = vector.load %arg9[%c0_23, %c0_24] : memref<16x1xf32, #tpu.memory_space<vmem>>, vector<16x1xf32>
      %43 = vector.broadcast %42 : vector<16x1xf32> to vector<16x128xf32>
      %44 = arith.subf %43, %39 : vector<16x128xf32>
      %cst_25 = arith.constant 2.000000e-03 : f32
      %45 = vector.broadcast %cst_25 : f32 to vector<16x128xf32>
      %46 = arith.mulf %44, %45 : vector<16x128xf32>
      %c0_26 = arith.constant 0 : index
      %c0_27 = arith.constant 0 : index
      %c0_28 = arith.constant 0 : index
      %47 = vector.load %arg4[%c0_26, %c0_27, %c0_28] : memref<1x1x128xf32, #tpu.memory_space<vmem>>, vector<1x1x128xf32>
      %48 = vector.shape_cast %47 : vector<1x1x128xf32> to vector<1x128xf32>
      %49 = vector.broadcast %41 : vector<16x1xf32> to vector<16x128xf32>
      %50 = vector.broadcast %48 : vector<1x128xf32> to vector<16x128xf32>
      %51 = arith.addf %49, %50 : vector<16x128xf32>
      %cst_29 = arith.constant 1.000000e+00 : f32
      %52 = vector.broadcast %cst_29 : f32 to vector<16x128xf32>
      %53 = arith.addf %51, %52 : vector<16x128xf32>
      %cst_30 = arith.constant 2.000000e+00 : f32
      %54 = vector.broadcast %cst_30 : f32 to vector<16x128xf32>
      %55 = arith.mulf %54, %40 : vector<16x128xf32>
      %cst_31 = arith.constant 1.000000e+00 : f32
      %56 = vector.broadcast %cst_31 : f32 to vector<16x128xf32>
      %57 = arith.addf %55, %56 : vector<16x128xf32>
      %58 = tpu.reciprocal %53 {approx = true} : vector<16x128xf32> -> vector<16x128xf32>
      %59 = arith.mulf %57, %58 : vector<16x128xf32>
      %cst_32 = arith.constant 1.000000e+00 : f32
      %60 = vector.broadcast %cst_32 : f32 to vector<16x128xf32>
      %61 = arith.subf %60, %59 : vector<16x128xf32>
      %cst_33 = arith.constant 1.000000e+00 : f32
      %62 = vector.broadcast %cst_33 : f32 to vector<16x128xf32>
      %63 = arith.mulf %62, %46 : vector<16x128xf32>
      %c0_34 = arith.constant 0 : index
      %c0_35 = arith.constant 0 : index
      %c0_36 = arith.constant 0 : index
      %64 = vector.load %arg3[%c0_34, %c0_35, %c0_36] : memref<1x16x128xf32, #tpu.memory_space<vmem>>, vector<1x16x128xf32>
      %65 = vector.shape_cast %64 : vector<1x16x128xf32> to vector<16x128xf32>
      %66 = arith.addf %63, %65 : vector<16x128xf32>
      %cst_37 = arith.constant 1.000000e+00 : f32
      %67 = vector.broadcast %cst_37 : f32 to vector<16x128xf32>
      %68 = arith.mulf %67, %61 : vector<16x128xf32>
      %69 = arith.addf %66, %68 : vector<16x128xf32>
      %c0_38 = arith.constant 0 : index
      %c0_39 = arith.constant 0 : index
      %c0_40 = arith.constant 0 : index
      %70 = vector.load %arg7[%c0_38, %c0_39, %c0_40] : memref<1x16x128xf32, #tpu.memory_space<vmem>>, vector<1x16x128xf32>
      %71 = vector.shape_cast %70 : vector<1x16x128xf32> to vector<16x128xf32>
      %72 = vector.shape_cast %69 : vector<16x128xf32> to vector<1x16x128xf32>
      tpu.vector_store %arg7[%c0_38, %c0_39, %c0_40], %72 {strides = array<i32>} : memref<1x16x128xf32, #tpu.memory_space<vmem>>, vector<1x16x128xf32>,
    } else {
    }
    return
  }
  func.func @transform_0(%arg0: i32, %arg1: i32, %arg2: i32) -> (i32, i32, i32) {
    %c0_i32 = arith.constant 0 : i32
    %c0_i32_0 = arith.constant 0 : i32
    return %arg0, %arg1, %c0_i32 : i32, i32, i32
  }
  func.func @transform_1(%arg0: i32, %arg1: i32, %arg2: i32) -> (i32, i32, i32) {
    %c0_i32 = arith.constant 0 : i32
    %c0_i32_0 = arith.constant 0 : i32
    %c0_i32_1 = arith.constant 0 : i32
    return %arg0, %c0_i32, %c0_i32_0 : i32, i32, i32
  }
  func.func @transform_2(%arg0: i32, %arg1: i32, %arg2: i32) -> (i32, i32, i32) {
    %c0_i32 = arith.constant 0 : i32
    return %arg0, %arg1, %arg2 : i32, i32, i32
  }
  func.func @transform_3(%arg0: i32, %arg1: i32, %arg2: i32) -> (i32, i32, i32) {
    %c0_i32 = arith.constant 0 : i32
    %c0_i32_0 = arith.constant 0 : i32
    return %arg0, %arg2, %c0_i32 : i32, i32, i32
  }
  func.func @transform_4(%arg0: i32, %arg1: i32, %arg2: i32) -> (i32, i32, i32) {
    %c0_i32 = arith.constant 0 : i32
    %c0_i32_0 = arith.constant 0 : i32
    return %arg0, %arg1, %c0_i32 : i32, i32, i32
  }
}

</mosaic_0001>

<llo_original>
// kernel: tpu_custom_call.1
$region0: #{tpu_custom_call.1}
  #allocation0 [shape = 'u32[]', space=smem, size = 0x4, offset = 0x4, fixed_abs, tag = 'smem constant byte address 0x4 - core index']
  #allocation1 [shape = 'u32[144,128]{1,0:T(1,128)}', space=vmem, size = 0x12000, scoped, tag = 'internal scratch']
  #allocation2 [shape = 'f32[32,128]{1,0:T(8,128)}', space=vmem, size = 0x4000, scoped, tag = 'scratch operand']
  #allocation3 [shape = 'f32[16,1]{1,0:T(8,128)}', space=vmem, size = 0x2000, scoped, tag = 'scratch operand']
  %s0 = inlined_call_operand.hbm [shape: f32[2,32,128], index: 0, kind: input, shape index: {}]
  %s1 = inlined_call_operand.hbm [shape: f32[2,1,128], index: 1, kind: input, shape index: {}]
  %s2 = inlined_call_operand.hbm [shape: bf16[2,32,512], index: 2, kind: input, shape index: {}]
  %s3 = inlined_call_operand.hbm [shape: bf16[2,512,128], index: 3, kind: input, shape index: {}]
  %s4 = inlined_call_operand.hbm [shape: f32[2,32,128], index: 4, kind: output, shape index: {}]
  %s5 = sld [smem:[#allocation0]]
  $region73: #{tpu_custom_call.1} parent=0
    _
  %s7 = ssub.s32 1, %s5
  %s8 = scalar_select 0, %s7, %s5
  $region1: #{tpu_custom_call.1} parent=0
    #allocation4 [shape = 'u8[16384]{0}', space=vmem, size = 0x4000, scoped, tag = 'input window, operand 0']
    #allocation5 [shape = 's32[2]{0}', space=sflag, size = 0x8, scoped, tag = 'scoped memory for tpu_custom_call.1']
    #allocation6 [shape = 's32[2]{0}', space=sflag, size = 0x8, scoped, tag = 'scoped memory for tpu_custom_call.1']
    #allocation7 [shape = 'u8[1024]{0}', space=vmem, size = 0x400, scoped, tag = 'input window, operand 1']
    #allocation8 [shape = 's32[2]{0}', space=sflag, size = 0x8, scoped, tag = 'scoped memory for tpu_custom_call.1']
    #allocation9 [shape = 'u8[16384]{0}', space=vmem, size = 0x4000, scoped, tag = 'input window, operand 2']
    #allocation10 [shape = 'u8[131072]{0}', space=vmem, size = 0x20000, scoped, tag = 'input window, operand 3']
    #allocation11 [shape = 's32[2]{0}', space=sflag, size = 0x8, scoped, tag = 'scoped memory for tpu_custom_call.1']
    #allocation12 [shape = 'u8[16384]{0}', space=vmem, size = 0x4000, scoped, tag = 'output window, operand 0']
    %9 = vsyncpa [#allocation5], 0
    %s10 = scalar_lea.sflag [#allocation5], 1
    %11 = vsyncpa %s10, 0
    %12 = vsyncpa [#allocation8], 0
    %s13 = scalar_lea.sflag [#allocation8], 1
    %14 = vsyncpa %s13, 0
    %15 = vsyncpa [#allocation11], 0
    %s16 = scalar_lea.sflag [#allocation11], 1
    %17 = vsyncpa %s16, 0
    %18 = vsyncpa [#allocation6], 0
    %s19 = scalar_lea.sflag [#allocation6], 1
    %20 = vsyncpa %s19, 0
    loop: start=0, step=1, limit=10
    $region2: #{tpu_custom_call.1} parent=1 // loop_pre_header
      _
    $region3: #{tpu_custom_call.1} parent=1 // loop_header
      %s22 = sphi 0, %s26
      %p23 = scmp.ge.s32.totalorder %s22, 10
      %s29 = sphi 0, %s48
      %s30 = sphi 0, %s44
      %s31 = sphi 0, %s40
      %s32 = sphi 0, %s29
      %s33 = sphi 0, %s30
      %s34 = sphi 0, %s31
      %s35 = sphi 0, %s32
      %s36 = sphi 0, %s33
      %s37 = sphi 0, %s34
      %s53 = sphi 0, %s55
      %s56 = sphi 0, %s53
      %s57 = sphi 0, %s56
      %s73 = sphi 0, %s57
      %s79 = sphi 0, %s81
      %s82 = sphi 0, %s79
      %s83 = sphi 0, %s82
      %s99 = sphi 0, %s83
      %s109 = sphi 0, %s111
      %s112 = sphi 0, %s109
      %s113 = sphi 0, %s112
      %s129 = sphi 0, %s113
      %s137 = sphi 0, %s139
      %s140 = sphi 0, %s137
      %s141 = sphi 0, %s140
      %s157 = sphi 0, %s141
      %s165 = sphi 0, %s167
      %s168 = sphi 0, %s165
      %s169 = sphi 0, %s168
      %s185 = sphi 0, %s169
    $region4: #{tpu_custom_call.1} parent=1 // loop_header_branch
      %25 = sbr.rel (%p23) target = $region8
    $region5: #{tpu_custom_call.1} parent=1 // loop_body
      %s27 = ssub.s32 %s22, 1
      %s28 = ssub.s32 %s22, 2
      %s38 = sadd.s32 1, %s31
      %p39 = scmp.ge.s32.totalorder %s38, 2
      %s40 = scalar_select %p39, 0, %s38
      %s41 = sadd.s32 1, %s30
      %s42 = scalar_select %p39, %s41, %s30
      %p43 = scmp.ge.s32.totalorder %s42, 2
      %s44 = scalar_select %p43, 0, %s42
      %s45 = sadd.s32 1, %s29
      %s46 = scalar_select %p43, %s45, %s29
      %p47 = scmp.ge.s32.totalorder %s46, 2
      %s48 = scalar_select %p47, 0, %s46
      %s49 = ssub.s32 %s29, %s48
      %s50 = ssub.s32 %s30, %s44
      %s51 = sor.u32 %s49, %s50
      %p52 = scmp.eq.s32.totalorder %s51, 0
      %s54 = sadd.s32 %s53, 1
      %s55 = scalar_select %p52, %s53, %s54
      %p58 = pneg %p52
      %p59 = scmp.eq.s32.totalorder %s22, 7
      %p60 = por %p58, %p59
      %p61 = scmp.ne.s32.totalorder %s53, %s56
      %p62 = scmp.eq.s32.totalorder %s22, 0
      %p63 = por %p61, %p62
      %p64 = scmp.ne.s32.totalorder %s53, %s56
      %p65 = scmp.eq.s32.totalorder %s27, 7
      %p66 = por %p64, %p65
      %p67 = scmp.ne.s32.totalorder %s56, %s57
      %p68 = scmp.eq.s32.totalorder %s27, 0
      %p69 = por %p67, %p68
      %p70 = scmp.ne.s32.totalorder %s56, %s57
      %p71 = scmp.eq.s32.totalorder %s28, 7
      %p72 = por %p70, %p71
      %p74 = scmp.ne.s32.totalorder %s57, %s73
      %p75 = scmp.eq.s32.totalorder %s28, 0
      %p76 = por %p74, %p75
      %s77 = ssub.s32 %s29, %s48
      %p78 = scmp.eq.s32.totalorder %s77, 0
      %s80 = sadd.s32 %s79, 1
      %s81 = scalar_select %p78, %s79, %s80
      %p84 = pneg %p78
      %p85 = scmp.eq.s32.totalorder %s22, 7
      %p86 = por %p84, %p85
      %p87 = scmp.ne.s32.totalorder %s79, %s82
      %p88 = scmp.eq.s32.totalorder %s22, 0
      %p89 = por %p87, %p88
      %p90 = scmp.ne.s32.totalorder %s79, %s82
      %p91 = scmp.eq.s32.totalorder %s27, 7
      %p92 = por %p90, %p91
      %p93 = scmp.ne.s32.totalorder %s82, %s83
      %p94 = scmp.eq.s32.totalorder %s27, 0
      %p95 = por %p93, %p94
      %p96 = scmp.ne.s32.totalorder %s82, %s83
      %p97 = scmp.eq.s32.totalorder %s28, 7
      %p98 = por %p96, %p97
      %p100 = scmp.ne.s32.totalorder %s83, %s99
      %p101 = scmp.eq.s32.totalorder %s28, 0
      %p102 = por %p100, %p101
      %s103 = ssub.s32 %s29, %s48
      %s104 = ssub.s32 %s30, %s44
      %s105 = sor.u32 %s103, %s104
      %s106 = ssub.s32 %s31, %s40
      %s107 = sor.u32 %s105, %s106
      %p108 = scmp.eq.s32.totalorder %s107, 0
      %s110 = sadd.s32 %s109, 1
      %s111 = scalar_select %p108, %s109, %s110
      %p114 = pneg %p108
      %p115 = scmp.eq.s32.totalorder %s22, 7
      %p116 = por %p114, %p115
      %p117 = scmp.ne.s32.totalorder %s109, %s112
      %p118 = scmp.eq.s32.totalorder %s22, 0
      %p119 = por %p117, %p118
      %p120 = scmp.ne.s32.totalorder %s109, %s112
      %p121 = scmp.eq.s32.totalorder %s27, 7
      %p122 = por %p120, %p121
      %p123 = scmp.ne.s32.totalorder %s112, %s113
      %p124 = scmp.eq.s32.totalorder %s27, 0
      %p125 = por %p123, %p124
      %p126 = scmp.ne.s32.totalorder %s112, %s113
      %p127 = scmp.eq.s32.totalorder %s28, 7
      %p128 = por %p126, %p127
      %p130 = scmp.ne.s32.totalorder %s113, %s129
      %p131 = scmp.eq.s32.totalorder %s28, 0
      %p132 = por %p130, %p131
      %s133 = ssub.s32 %s29, %s48
      %s134 = ssub.s32 %s31, %s40
      %s135 = sor.u32 %s133, %s134
      %p136 = scmp.eq.s32.totalorder %s135, 0
      %s138 = sadd.s32 %s137, 1
      %s139 = scalar_select %p136, %s137, %s138
      %p142 = pneg %p136
      %p143 = scmp.eq.s32.totalorder %s22, 7
      %p144 = por %p142, %p143
      %p145 = scmp.ne.s32.totalorder %s137, %s140
      %p146 = scmp.eq.s32.totalorder %s22, 0
      %p147 = por %p145, %p146
      %p148 = scmp.ne.s32.totalorder %s137, %s140
      %p149 = scmp.eq.s32.totalorder %s27, 7
      %p150 = por %p148, %p149
      %p151 = scmp.ne.s32.totalorder %s140, %s141
      %p152 = scmp.eq.s32.totalorder %s27, 0
      %p153 = por %p151, %p152
      %p154 = scmp.ne.s32.totalorder %s140, %s141
      %p155 = scmp.eq.s32.totalorder %s28, 7
      %p156 = por %p154, %p155
      %p158 = scmp.ne.s32.totalorder %s141, %s157
      %p159 = scmp.eq.s32.totalorder %s28, 0
      %p160 = por %p158, %p159
      %s161 = ssub.s32 %s29, %s48
      %s162 = ssub.s32 %s30, %s44
      %s163 = sor.u32 %s161, %s162
      %p164 = scmp.eq.s32.totalorder %s163, 0
      %s166 = sadd.s32 %s165, 1
      %s167 = scalar_select %p164, %s165, %s166
      %p170 = pneg %p164
      %p171 = scmp.eq.s32.totalorder %s22, 7
      %p172 = por %p170, %p171
      %p173 = scmp.ne.s32.totalorder %s165, %s168
      %p174 = scmp.eq.s32.totalorder %s22, 0
      %p175 = por %p173, %p174
      %p176 = scmp.ne.s32.totalorder %s165, %s168
      %p177 = scmp.eq.s32.totalorder %s27, 7
      %p178 = por %p176, %p177
      %p179 = scmp.ne.s32.totalorder %s168, %s169
      %p180 = scmp.eq.s32.totalorder %s27, 0
      %p181 = por %p179, %p180
      %p182 = scmp.ne.s32.totalorder %s168, %s169
      %p183 = scmp.eq.s32.totalorder %s28, 7
      %p184 = por %p182, %p183
      %p186 = scmp.ne.s32.totalorder %s169, %s185
      %p187 = scmp.eq.s32.totalorder %s28, 0
      %p188 = por %p186, %p187
      %p189 = scmp.le.s32.totalorder 1, %s22
      %p190 = scmp.lt.s32.totalorder %s22, 9
      %p191 = pnand %p189, %p190
      %p192 = pneg %p191
      // Predicated region
      $region9: #{tpu_custom_call.1} parent=5 // pred_check
        _
      $region10: #{tpu_custom_call.1} parent=5 // pred_check_branch
        %194 = sbr.rel (%p191) target = $region12
      $region11: #{tpu_custom_call.1} parent=5 // pred_region
        %s195 = ssub.s32 %s22, 1
      $region12: #{tpu_custom_call.1} parent=5 // pred_fallthru
        _
      %p196 = scmp.lt.s32.totalorder %s22, 8
      // Predicated region
      $region13: #{tpu_custom_call.1} parent=5 // pred_check
        %p197 = pneg %p196
      $region14: #{tpu_custom_call.1} parent=5 // pred_check_branch
        %199 = sbr.rel (%p197) target = $region16
      $region15: #{tpu_custom_call.1} parent=5 // pred_region
        // Predicated region
        $region17: #{tpu_custom_call.1} parent=15 // pred_check
          %p200 = pneg %p63
        $region18: #{tpu_custom_call.1} parent=15 // pred_check_branch
          %202 = sbr.rel (%p200) target = $region20
        $region19: #{tpu_custom_call.1} parent=15 // pred_region
          %s203 = sand.u32 %s53, 1
          %s204 = scalar_lea.sflag [#allocation5], %s203
          %s205 = sand.u32 %s53, 1
          %s206 = smul.addr %s205, 16
          %s207 = scalar_lea.vmem [#allocation4], %s206
          %s208 = smul.u32 2, %s30
          %s210 = ssub.s32 256, 256
          %211 = vsyncadd %s204, %s210
          %s212 = smul.addr %s29, 4
          %s213 = sadd.s32 %s208, %s212
          %s214 = smul.addr %s213, 128
          %s215 = scalar_lea.hbm %s0, %s214
          %s216 = sshll.u32 %s207, 4
          %s217 = int_to_ptr.vmem [resolvable:$true] %s216
          %222 = dma.hbm_to_vmem [thread:$0]  %s215, 256, %s217, %s204, 128, 128, 8
        $region20: #{tpu_custom_call.1} parent=15 // pred_fallthru
          _
        // Predicated region
        $region21: #{tpu_custom_call.1} parent=15 // pred_check
          %p223 = pneg %p89
        $region22: #{tpu_custom_call.1} parent=15 // pred_check_branch
          %225 = sbr.rel (%p223) target = $region24
        $region23: #{tpu_custom_call.1} parent=15 // pred_region
          %s226 = sand.u32 %s22, 1
          %s227 = scalar_lea.sflag [#allocation8], %s226
          %s228 = sand.u32 %s79, 1
          %s229 = scalar_lea.vmem [#allocation7], %s228
          %s231 = ssub.s32 16, 16
          %232 = vsyncadd %s227, %s231
          %s233 = smul.addr %s29, 16
          %s234 = scalar_lea.hbm %s1, %s233
          %s236 = sshll.u32 %s229, 4
          %s237 = int_to_ptr.vmem [resolvable:$true] %s236
          %239 = dma.hbm_to_vmem [thread:$0]  %s234, 16, %s237, %s227
        $region24: #{tpu_custom_call.1} parent=15 // pred_fallthru
          _
        // Predicated region
        $region25: #{tpu_custom_call.1} parent=15 // pred_check
          %p240 = pneg %p119
        $region26: #{tpu_custom_call.1} parent=15 // pred_check_branch
          %242 = sbr.rel (%p240) target = $region28
        $region27: #{tpu_custom_call.1} parent=15 // pred_region
          %s243 = sand.u32 %s22, 1
          %s244 = scalar_lea.sflag [#allocation8], %s243
          %s245 = sand.u32 %s109, 1
          %s246 = smul.addr %s245, 16
          %s247 = scalar_lea.vmem [#allocation9], %s246
          %s248 = smul.u32 2, %s30
          %s249 = smul.u32 2, %s31
          %s251 = ssub.s32 256, 256
          %252 = vsyncadd %s244, %s251
          %s253 = smul.addr %s248, 4
          %s254 = sadd.s32 %s249, %s253
          %s255 = smul.addr %s29, 16
          %s256 = sadd.s32 %s254, %s255
          %s257 = smul.addr %s256, 64
          %s258 = scalar_lea.hbm %s2, %s257
          %s259 = sshll.u32 %s247, 4
          %s260 = int_to_ptr.vmem [resolvable:$true] %s259
          %265 = dma.hbm_to_vmem [thread:$0]  %s258, 256, %s260, %s244, 256, 128, 8
        $region28: #{tpu_custom_call.1} parent=15 // pred_fallthru
          _
        // Predicated region
        $region29: #{tpu_custom_call.1} parent=15 // pred_check
          %p266 = pneg %p147
        $region30: #{tpu_custom_call.1} parent=15 // pred_check_branch
          %268 = sbr.rel (%p266) target = $region32
        $region31: #{tpu_custom_call.1} parent=15 // pred_region
          %s269 = sand.u32 %s137, 1
          %s270 = scalar_lea.sflag [#allocation11], %s269
          %s271 = sand.u32 %s137, 1
          %s272 = smul.addr %s271, 128
          %s273 = scalar_lea.vmem [#allocation10], %s272
          %s274 = smul.u32 32, %s31
          %s276 = ssub.s32 2048, 2048
          %277 = vsyncadd %s270, %s276
          %s278 = smul.addr %s29, 64
          %s279 = sadd.s32 %s274, %s278
          %s280 = smul.addr %s279, 64
          %s281 = scalar_lea.hbm %s3, %s280
          %s282 = sshll.u32 %s273, 4
          %s283 = int_to_ptr.vmem [resolvable:$true] %s282
          %288 = dma.hbm_to_vmem [thread:$0]  %s281, 2048, %s283, %s270, 64, 64, 4
        $region32: #{tpu_custom_call.1} parent=15 // pred_fallthru
          _
      $region16: #{tpu_custom_call.1} parent=5 // pred_fallthru
        _
      %p289 = scmp.le.s32.totalorder 1, %s22
      %p290 = scmp.lt.s32.totalorder %s22, 9
      %p291 = pnand %p289, %p290
      %p292 = pneg %p291
      // Predicated region
      $region33: #{tpu_custom_call.1} parent=5 // pred_check
        _
      $region34: #{tpu_custom_call.1} parent=5 // pred_check_branch
        %294 = sbr.rel (%p291) target = $region36
      $region35: #{tpu_custom_call.1} parent=5 // pred_region
        %s295 = ssub.s32 %s22, 1
        %s296 = sand.u32 %s56, 1
        %s297 = scalar_lea.sflag [#allocation5], %s296
        %s298 = sand.u32 %s56, 1
        %s299 = smul.addr %s298, 16
        %s300 = scalar_lea.vmem [#allocation4], %s299
        // Predicated region
        $region37: #{tpu_custom_call.1} parent=35 // pred_check
          %p301 = pneg %p69
        $region38: #{tpu_custom_call.1} parent=35 // pred_check_branch
          %303 = sbr.rel (%p301) target = $region40
        $region39: #{tpu_custom_call.1} parent=35 // pred_region
          %304 = dma.done %s297, 256
        $region40: #{tpu_custom_call.1} parent=35 // pred_fallthru
          _
        %s305 = sand.u32 %s27, 1
        %s306 = scalar_lea.sflag [#allocation8], %s305
        %s307 = sand.u32 %s82, 1
        %s308 = scalar_lea.vmem [#allocation7], %s307
        // Predicated region
        $region41: #{tpu_custom_call.1} parent=35 // pred_check
          %p309 = pneg %p95
        $region42: #{tpu_custom_call.1} parent=35 // pred_check_branch
          %311 = sbr.rel (%p309) target = $region44
        $region43: #{tpu_custom_call.1} parent=35 // pred_region
          %312 = dma.done %s306, 16
        $region44: #{tpu_custom_call.1} parent=35 // pred_fallthru
          _
        %s313 = sand.u32 %s27, 1
        %s314 = scalar_lea.sflag [#allocation8], %s313
        %s315 = sand.u32 %s112, 1
        %s316 = smul.addr %s315, 16
        %s317 = scalar_lea.vmem [#allocation9], %s316
        // Predicated region
        $region45: #{tpu_custom_call.1} parent=35 // pred_check
          %p318 = pneg %p125
        $region46: #{tpu_custom_call.1} parent=35 // pred_check_branch
          %320 = sbr.rel (%p318) target = $region48
        $region47: #{tpu_custom_call.1} parent=35 // pred_region
          %321 = dma.done %s314, 256
        $region48: #{tpu_custom_call.1} parent=35 // pred_fallthru
          _
        %s322 = sand.u32 %s140, 1
        %s323 = scalar_lea.sflag [#allocation11], %s322
        %s324 = sand.u32 %s140, 1
        %s325 = smul.addr %s324, 128
        %s326 = scalar_lea.vmem [#allocation10], %s325
        // Predicated region
        $region49: #{tpu_custom_call.1} parent=35 // pred_check
          %p327 = pneg %p153
        $region50: #{tpu_custom_call.1} parent=35 // pred_check_branch
          %329 = sbr.rel (%p327) target = $region52
        $region51: #{tpu_custom_call.1} parent=35 // pred_region
          %330 = dma.done %s323, 2048
        $region52: #{tpu_custom_call.1} parent=35 // pred_fallthru
          _
        %s331 = sand.u32 %s56, 1
        %s332 = scalar_lea.sflag [#allocation5], %s331
        %s333 = sand.u32 %s56, 1
        %s334 = smul.addr %s333, 16
        %s335 = scalar_lea.vmem [#allocation4], %s334
        %p336 = pneg %p69
        %p337 = pneg %p66
        %s338 = sand.u32 %s27, 1
        %s339 = scalar_lea.sflag [#allocation8], %s338
        %s340 = sand.u32 %s82, 1
        %s341 = scalar_lea.vmem [#allocation7], %s340
        %p342 = pneg %p95
        %p343 = pneg %p92
        %s344 = sand.u32 %s27, 1
        %s345 = scalar_lea.sflag [#allocation8], %s344
        %s346 = sand.u32 %s112, 1
        %s347 = smul.addr %s346, 16
        %s348 = scalar_lea.vmem [#allocation9], %s347
        %p349 = pneg %p125
        %p350 = pneg %p122
        %s351 = sand.u32 %s140, 1
        %s352 = scalar_lea.sflag [#allocation11], %s351
        %s353 = sand.u32 %s140, 1
        %s354 = smul.addr %s353, 128
        %s355 = scalar_lea.vmem [#allocation10], %s354
        %p356 = pneg %p153
        %p357 = pneg %p150
        %p358 = pneg %p181
        %p359 = pneg %p178
        %s360 = sand.u32 %s168, 1
        %s361 = scalar_lea.sflag [#allocation6], %s360
        %s362 = sand.u32 %s168, 1
        %s363 = smul.addr %s362, 16
        %s364 = scalar_lea.vmem [#allocation12], %s363
        %s365 = smul.u32 2, %s33
        %s366 = smul.u32 2, %s33
        %s367 = smul.u32 2, %s34
        %s368 = smul.u32 32, %s34
        %s369 = smul.u32 2, %s33
        %p371 = scmp.eq.s32.totalorder %s34, 0
        // Predicated region
        $region53: #{tpu_custom_call.1} parent=35 // pred_check
          %p372 = pneg %p371
        $region54: #{tpu_custom_call.1} parent=35 // pred_check_branch
          %374 = sbr.rel (%p372) target = $region56
        $region55: #{tpu_custom_call.1} parent=35 // pred_region
          %375 = vst [vmem:[#allocation2] sm:$0xff] 0.0
          %376 = vst [vmem:[#allocation2 + $0x8] sm:$0xff] 0.0
          %377 = vst [vmem:[#allocation2 + $0x10] sm:$0xff] 0.0
          %378 = vst [vmem:[#allocation2 + $0x18] sm:$0xff] 0.0
          %vm379 = vcmask 7168
          %380 = vst.msk [vmem:[#allocation3] sm:$0xff] %vm379, 0.0
          %381 = vst.msk [vmem:[#allocation3 + $0x8] sm:$0xff] %vm379, 0.0
        $region56: #{tpu_custom_call.1} parent=35 // pred_fallthru
          _
        %v382 = vld [vmem:[%s317] sm:$0xff]
        %v383 = vld [vmem:[%s317 + $0x8] sm:$0xff]
        %v384 = vld [vmem:[%s326] sm:$0xf]
        %v385 = vld [vmem:[%s326 + $0x4] sm:$0xf]
        %v386 = vld [vmem:[%s326 + $0x8] sm:$0xf]
        %v387 = vld [vmem:[%s326 + $0xc] sm:$0xf]
        %v388 = vld [vmem:[%s326 + $0x10] sm:$0xf]
        %v389 = vld [vmem:[%s326 + $0x14] sm:$0xf]
        %v390 = vld [vmem:[%s326 + $0x18] sm:$0xf]
        %v391 = vld [vmem:[%s326 + $0x1c] sm:$0xf]
        %v392 = vld [vmem:[%s326 + $0x20] sm:$0xf]
        %v393 = vld [vmem:[%s326 + $0x24] sm:$0xf]
        %v394 = vld [vmem:[%s326 + $0x28] sm:$0xf]
        %v395 = vld [vmem:[%s326 + $0x2c] sm:$0xf]
        %v396 = vld [vmem:[%s326 + $0x30] sm:$0xf]
        %v397 = vld [vmem:[%s326 + $0x34] sm:$0xf]
        %v398 = vld [vmem:[%s326 + $0x38] sm:$0xf]
        %v399 = vld [vmem:[%s326 + $0x3c] sm:$0xf]
        %v400 = vld [vmem:[%s326 + $0x40] sm:$0xf]
        %v401 = vld [vmem:[%s326 + $0x44] sm:$0xf]
        %v402 = vld [vmem:[%s326 + $0x48] sm:$0xf]
        %v403 = vld [vmem:[%s326 + $0x4c] sm:$0xf]
        %v404 = vld [vmem:[%s326 + $0x50] sm:$0xf]
        %v405 = vld [vmem:[%s326 + $0x54] sm:$0xf]
        %v406 = vld [vmem:[%s326 + $0x58] sm:$0xf]
        %v407 = vld [vmem:[%s326 + $0x5c] sm:$0xf]
        %v408 = vld [vmem:[%s326 + $0x60] sm:$0xf]
        %v409 = vld [vmem:[%s326 + $0x64] sm:$0xf]
        %v410 = vld [vmem:[%s326 + $0x68] sm:$0xf]
        %v411 = vld [vmem:[%s326 + $0x6c] sm:$0xf]
        %v412 = vld [vmem:[%s326 + $0x70] sm:$0xf]
        %v413 = vld [vmem:[%s326 + $0x74] sm:$0xf]
        %v414 = vld [vmem:[%s326 + $0x78] sm:$0xf]
        %v415 = vld [vmem:[%s326 + $0x7c] sm:$0xf]
        %v416 = vunpack.c.l.bf16 %v382
        %v417 = vunpack.c.h.bf16 %v382
        %v418 = vunpack.c.l.bf16 %v383
        %v419 = vunpack.c.h.bf16 %v383
        %v420 = vand.u32 2147483647, %v416
        %v421 = vand.u32 2147483647, %v417
        %v422 = vand.u32 2147483647, %v418
        %v423 = vand.u32 2147483647, %v419
        %v424 = vsub.f32 0.0, %v420
        %v425 = vsub.f32 0.0, %v421
        %v426 = vsub.f32 0.0, %v422
        %v427 = vsub.f32 0.0, %v423
        %v428 = vmul.f32 %v424, 1.442695
        %v429 = vpow.pop %v428
        %v430 = vmul.f32 %v425, 1.442695
        %v431 = vpow.pop %v430
        %v432 = vmul.f32 %v426, 1.442695
        %v433 = vpow.pop %v432
        %v434 = vmul.f32 %v427, 1.442695
        %v435 = vpow.pop %v434
        %v436 = vmax.f32 %v416, 0.0
        %v437 = vmax.f32 %v417, 0.0
        %v438 = vmax.f32 %v418, 0.0
        %v439 = vmax.f32 %v419, 0.0
        %v440 = vadd.f32 %v429, 1.0
        %v441 = vlog2.pop %v440
        %v442 = vmul.f32 %v441, 0.6931472
        %v443 = vmul.f32 -0.5, %v429
        %v444 = vadd.f32 %v443, 1.0
        %v445 = vmul.f32 %v444, %v429
        %v446 = vand.u32 2147483647, %v429
        %vm447 = vcmp.lt.f32.partialorder %v446, 0.0004427343
        %v448 = vsel %vm447, %v445, %v442
        %v449 = vadd.f32 %v431, 1.0
        %v450 = vlog2.pop %v449
        %v451 = vmul.f32 %v450, 0.6931472
        %v452 = vmul.f32 -0.5, %v431
        %v453 = vadd.f32 %v452, 1.0
        %v454 = vmul.f32 %v453, %v431
        %v455 = vand.u32 2147483647, %v431
        %vm456 = vcmp.lt.f32.partialorder %v455, 0.0004427343
        %v457 = vsel %vm456, %v454, %v451
        %v458 = vadd.f32 %v433, 1.0
        %v459 = vlog2.pop %v458
        %v460 = vmul.f32 %v459, 0.6931472
        %v461 = vmul.f32 -0.5, %v433
        %v462 = vadd.f32 %v461, 1.0
        %v463 = vmul.f32 %v462, %v433
        %v464 = vand.u32 2147483647, %v433
        %vm465 = vcmp.lt.f32.partialorder %v464, 0.0004427343
        %v466 = vsel %vm465, %v463, %v460
        %v467 = vadd.f32 %v435, 1.0
        %v468 = vlog2.pop %v467
        %v469 = vmul.f32 %v468, 0.6931472
        %v470 = vmul.f32 -0.5, %v435
        %v471 = vadd.f32 %v470, 1.0
        %v472 = vmul.f32 %v471, %v435
        %v473 = vand.u32 2147483647, %v435
        %vm474 = vcmp.lt.f32.partialorder %v473, 0.0004427343
        %v475 = vsel %vm474, %v472, %v469
        %v476 = vadd.f32 %v436, %v448
        %v477 = vadd.f32 %v437, %v457
        %v478 = vadd.f32 %v438, %v466
        %v479 = vadd.f32 %v439, %v475
        %vm480 = vcmp.ge.f32.partialorder %v416, 0.0
        %vm481 = vcmp.ge.f32.partialorder %v417, 0.0
        %vm482 = vcmp.ge.f32.partialorder %v418, 0.0
        %vm483 = vcmp.ge.f32.partialorder %v419, 0.0
        %v484 = vsel %vm480, 1.0, %v429
        %v485 = vsel %vm481, 1.0, %v431
        %v486 = vsel %vm482, 1.0, %v433
        %v487 = vsel %vm483, 1.0, %v435
        %v488 = vadd.f32 %v429, 1.0
        %v489 = vadd.f32 %v431, 1.0
        %v490 = vadd.f32 %v433, 1.0
        %v491 = vadd.f32 %v435, 1.0
        %v492 = vrcp.pop %v488
        %v493 = vrcp.pop %v489
        %v494 = vrcp.pop %v490
        %v495 = vrcp.pop %v491
        %v496 = vmul.f32 %v484, %v492
        %v497 = vmul.f32 %v485, %v493
        %v498 = vmul.f32 %v486, %v494
        %v499 = vmul.f32 %v487, %v495
        %v500 = vld [vmem:[#allocation3] sm:$0xff]
        %v501 = vld [vmem:[#allocation3 + $0x8] sm:$0xff]
        %v502 = vadd.f32 %v476, %v477
        %503 = vadd.xlane.f32.xlu0 %v502
        %v504 = vpop.xlane.xlu0 %503
        %v505 = vadd.f32 %v478, %v479
        %506 = vadd.xlane.f32.xlu0 %v505
        %v507 = vpop.xlane.xlu0 %506
        %v508 = vadd.f32 %v500, %v504
        %v509 = vadd.f32 %v501, %v507
        %vm510 = vcmask 7168
        %511 = vst.msk [vmem:[#allocation3] sm:$0xff] %vm510, %v508
        %512 = vst.msk [vmem:[#allocation3 + $0x8] sm:$0xff] %vm510, %v509
        %v513 = vpack.c.bf16 %v498, %v496
        %v514 = vpack.c.bf16 %v499, %v497
        %v517 = vunpack.c.l.b16 %v382
        %v518 = vunpack.c.h.b16 %v382
        %v519 = vunpack.c.l.b16 %v383
        %v520 = vunpack.c.h.b16 %v383
        %v521 = vpack.c.b16 %v519, %v517
        %v522 = vpack.c.b16 %v520, %v518
        %v525 = vld [vmem:[#allocation2] sm:$0xff]
        %v526 = vld [vmem:[#allocation2 + $0x8] sm:$0xff]
        %v527 = vld [vmem:[#allocation2 + $0x10] sm:$0xff]
        %v528 = vld [vmem:[#allocation2 + $0x18] sm:$0xff]
        %v561 = vunpack.c.l.b16 %v384
        %v562 = vunpack.c.l.b16 %v385
        %v563 = vunpack.c.l.b16 %v386
        %v564 = vunpack.c.l.b16 %v387
        %v565 = vunpack.c.l.b16 %v388
        %v566 = vunpack.c.l.b16 %v389
        %v567 = vunpack.c.l.b16 %v390
        %v568 = vunpack.c.l.b16 %v391
        %v569 = vunpack.c.l.b16 %v392
        %v570 = vunpack.c.l.b16 %v393
        %v571 = vunpack.c.l.b16 %v394
        %v572 = vunpack.c.l.b16 %v395
        %v573 = vunpack.c.l.b16 %v396
        %v574 = vunpack.c.l.b16 %v397
        %v575 = vunpack.c.l.b16 %v398
        %v576 = vunpack.c.l.b16 %v399
        %v577 = vunpack.c.l.b16 %v400
        %v578 = vunpack.c.l.b16 %v401
        %v579 = vunpack.c.l.b16 %v402
        %v580 = vunpack.c.l.b16 %v403
        %v581 = vunpack.c.l.b16 %v404
        %v582 = vunpack.c.l.b16 %v405
        %v583 = vunpack.c.l.b16 %v406
        %v584 = vunpack.c.l.b16 %v407
        %v585 = vunpack.c.l.b16 %v408
        %v586 = vunpack.c.l.b16 %v409
        %v587 = vunpack.c.l.b16 %v410
        %v588 = vunpack.c.l.b16 %v411
        %v589 = vunpack.c.l.b16 %v412
        %v590 = vunpack.c.l.b16 %v413
        %v591 = vunpack.c.l.b16 %v414
        %v592 = vunpack.c.l.b16 %v415
        %v593 = vpack.c.b16 %v562, %v561
        %v594 = vpack.c.b16 %v564, %v563
        %v595 = vpack.c.b16 %v566, %v565
        %v596 = vpack.c.b16 %v568, %v567
        %v597 = vpack.c.b16 %v570, %v569
        %v598 = vpack.c.b16 %v572, %v571
        %v599 = vpack.c.b16 %v574, %v573
        %v600 = vpack.c.b16 %v576, %v575
        %v601 = vpack.c.b16 %v578, %v577
        %v602 = vpack.c.b16 %v580, %v579
        %v603 = vpack.c.b16 %v582, %v581
        %v604 = vpack.c.b16 %v584, %v583
        %v605 = vpack.c.b16 %v586, %v585
        %v606 = vpack.c.b16 %v588, %v587
        %v607 = vpack.c.b16 %v590, %v589
        %v608 = vpack.c.b16 %v592, %v591
        %625 = vmatprep.subr.bf16.mxu0 0
        %626 = vmatpush1.bf16.msra.mxu0 %v593
        %627 = vmatprep.subr.bf16.mxu0 0
        %628 = vmatpush1.bf16.msra.mxu0 %v594
        %629 = vmatprep.subr.bf16.mxu0 0
        %630 = vmatpush1.bf16.msra.mxu0 %v595
        %631 = vmatprep.subr.bf16.mxu0 0
        %632 = vmatpush1.bf16.msra.mxu0 %v596
        %633 = vmatprep.subr.bf16.mxu0 0
        %634 = vmatpush1.bf16.msra.mxu0 %v597
        %635 = vmatprep.subr.bf16.mxu0 0
        %636 = vmatpush1.bf16.msra.mxu0 %v598
        %637 = vmatprep.subr.bf16.mxu0 0
        %638 = vmatpush1.bf16.msra.mxu0 %v599
        %639 = vmatprep.subr.bf16.mxu0 0
        %640 = vmatpush1.bf16.msra.mxu0 %v600
        %641 = vmatprep.subr.bf16.mxu0 0
        %642 = vmatpush1.bf16.msra.mxu0 %v601
        %643 = vmatprep.subr.bf16.mxu0 0
        %644 = vmatpush1.bf16.msra.mxu0 %v602
        %645 = vmatprep.subr.bf16.mxu0 0
        %646 = vmatpush1.bf16.msra.mxu0 %v603
        %647 = vmatprep.subr.bf16.mxu0 0
        %648 = vmatpush1.bf16.msra.mxu0 %v604
        %649 = vmatprep.subr.bf16.mxu0 0
        %650 = vmatpush1.bf16.msra.mxu0 %v605
        %651 = vmatprep.subr.bf16.mxu0 0
        %652 = vmatpush1.bf16.msra.mxu0 %v606
        %653 = vmatprep.subr.bf16.mxu0 0
        %654 = vmatpush1.bf16.msra.mxu0 %v607
        %655 = vmatprep.subr.bf16.mxu0 0
        %656 = vmatpush1.bf16.msra.mxu0 %v608
        %657 = vmatprep.mubr.bf16.mxu0 %v522
        %658 = vmatmul.mubr.bf16.gmra.mrb[0].mxu0 %v521
        %v659 = vpop.f32.mrb[0].mxu0
        %v660 = vadd.f32 0.0, %v659
        %v661 = vpop.f32.mrb[0].mxu0
        %v662 = vpop.f32.mrb[0].mxu0
        %v663 = vadd.f32 0.0, %v662
        %v664 = vpop.f32.mrb[0].mxu0
        %665 = vmatprep.mubr.bf16.mxu0 %v514
        %666 = vmatmul.mubr.bf16.gmra.mrb[0].mxu0 %v513
        %v667 = vpop.f32.mrb[0].mxu0
        %v668 = vadd.f32 0.0, %v667
        %v669 = vpop.f32.mrb[0].mxu0
        %v670 = vpop.f32.mrb[0].mxu0
        %v671 = vadd.f32 0.0, %v670
        %v672 = vpop.f32.mrb[0].mxu0
        %673 = vdwg.mxu0
        %v674 = vadd.f32 %v525, %v660
        %v675 = vadd.f32 %v526, %v663
        %v676 = vadd.f32 %v527, %v668
        %v677 = vadd.f32 %v528, %v671
        %678 = vst [vmem:[#allocation2] sm:$0xff] %v674
        %679 = vst [vmem:[#allocation2 + $0x8] sm:$0xff] %v675
        %680 = vst [vmem:[#allocation2 + $0x10] sm:$0xff] %v676
        %681 = vst [vmem:[#allocation2 + $0x18] sm:$0xff] %v677
        %p682 = scmp.eq.s32.totalorder %s34, 1
        // Predicated region
        $region57: #{tpu_custom_call.1} parent=35 // pred_check
          %p683 = pneg %p682
        $region58: #{tpu_custom_call.1} parent=35 // pred_check_branch
          %685 = sbr.rel (%p683) target = $region60
        $region59: #{tpu_custom_call.1} parent=35 // pred_region
          %v686 = vld [vmem:[#allocation2] sm:$0xff]
          %v687 = vld [vmem:[#allocation2 + $0x8] sm:$0xff]
          %v688 = vld [vmem:[#allocation2 + $0x10] sm:$0xff]
          %v689 = vld [vmem:[#allocation2 + $0x18] sm:$0xff]
          %v690 = vld [vmem:[#allocation3] sm:$0xff]
          %v691 = vld [vmem:[#allocation3 + $0x8] sm:$0xff]
          %693 = vset.pattern.permute.xlu0 0
          %694 = vperm.xlu0 %693, %v690
          %v695 = vpop.permute.xlu0 %694
          %698 = vset.pattern.permute.xlu0 0
          %699 = vperm.xlu0 %698, %v691
          %v700 = vpop.permute.xlu0 %699
          %v702 = vsub.f32 %v695, %v686
          %v703 = vsub.f32 %v700, %v687
          %v704 = vmul.f32 %v702, 0.002
          %v705 = vmul.f32 %v703, 0.002
          %v706 = vld [vmem:[%s308] sm:$0x1]
          %708 = vset.pattern.permute.xlu0 127
          %709 = vperm.xlu0 %708, %v688
          %v710 = vpop.permute.xlu0 %709
          %713 = vset.pattern.permute.xlu0 127
          %714 = vperm.xlu0 %713, %v689
          %v715 = vpop.permute.xlu0 %714
          %v718 = vlaneseq
          %v719 = vshrl.u32 %v718, 7
          %v720 = vsub.s32 0, %v719
          %v721 = vrot.slane %v706, %v720
          %v723 = vadd.f32 %v710, %v721
          %v724 = vadd.f32 %v715, %v721
          %v725 = vadd.f32 %v723, 1.0
          %v726 = vadd.f32 %v724, 1.0
          %v727 = vmul.f32 %v688, 2.0
          %v728 = vmul.f32 %v689, 2.0
          %v729 = vadd.f32 %v727, 1.0
          %v730 = vadd.f32 %v728, 1.0
          %v731 = vrcp.pop %v725
          %v732 = vrcp.pop %v726
          %v733 = vmul.f32 %v729, %v731
          %v734 = vmul.f32 %v730, %v732
          %v735 = vsub.f32 1.0, %v733
          %v736 = vsub.f32 1.0, %v734
          %v737 = vld [vmem:[%s300] sm:$0xff]
          %v738 = vld [vmem:[%s300 + $0x8] sm:$0xff]
          %v739 = vadd.f32 %v704, %v737
          %v740 = vadd.f32 %v705, %v738
          %v741 = vadd.f32 %v739, %v735
          %v742 = vadd.f32 %v740, %v736
          %743 = vst [vmem:[%s364] sm:$0xff] %v741
          %744 = vst [vmem:[%s364 + $0x8] sm:$0xff] %v742
        $region60: #{tpu_custom_call.1} parent=35 // pred_fallthru
          _
        %s745 = sand.u32 %s168, 1
        %s746 = scalar_lea.sflag [#allocation6], %s745
        %s747 = sand.u32 %s168, 1
        %s748 = smul.addr %s747, 16
        %s749 = scalar_lea.vmem [#allocation12], %s748
        // Predicated region
        $region61: #{tpu_custom_call.1} parent=35 // pred_check
          %p750 = pneg %p178
        $region62: #{tpu_custom_call.1} parent=35 // pred_check_branch
          %752 = sbr.rel (%p750) target = $region64
        $region63: #{tpu_custom_call.1} parent=35 // pred_region
          %s753 = smul.u32 2, %s33
          %s755 = ssub.s32 256, 256
          %756 = vsyncadd %s746, %s755
          %s757 = smul.addr %s32, 4
          %s758 = sadd.s32 %s753, %s757
          %s759 = smul.addr %s758, 128
          %s760 = scalar_lea.hbm %s4, %s759
          %s761 = sshll.u32 %s749, 4
          %s762 = int_to_ptr.vmem [resolvable:$true] %s761
          %767 = dma.vmem_to_hbm [thread:$0]  %s762, 256, %s760, %s746, 128, 128, 8
        $region64: #{tpu_custom_call.1} parent=35 // pred_fallthru
          _
      $region36: #{tpu_custom_call.1} parent=5 // pred_fallthru
        _
      %p768 = scmp.le.s32.totalorder 2, %s22
      // Predicated region
      $region65: #{tpu_custom_call.1} parent=5 // pred_check
        %p769 = pneg %p768
      $region66: #{tpu_custom_call.1} parent=5 // pred_check_branch
        %771 = sbr.rel (%p769) target = $region68
      $region67: #{tpu_custom_call.1} parent=5 // pred_region
        %s772 = ssub.s32 %s22, 2
        // Predicated region
        $region69: #{tpu_custom_call.1} parent=67 // pred_check
          %p773 = pneg %p184
        $region70: #{tpu_custom_call.1} parent=67 // pred_check_branch
          %775 = sbr.rel (%p773) target = $region72
        $region71: #{tpu_custom_call.1} parent=67 // pred_region
          %s776 = sand.u32 %s169, 1
          %s777 = scalar_lea.sflag [#allocation6], %s776
          %s778 = sand.u32 %s169, 1
          %s779 = smul.addr %s778, 16
          %s780 = scalar_lea.vmem [#allocation12], %s779
          %781 = dma.done %s777, 256
        $region72: #{tpu_custom_call.1} parent=67 // pred_fallthru
          _
      $region68: #{tpu_custom_call.1} parent=5 // pred_fallthru
        _
    $region6: #{tpu_custom_call.1} parent=1 // loop_footer
      %s26 = sadd.s32 1, %s22
    $region7: #{tpu_custom_call.1} parent=1 // loop_footer_branch
      %21 = sbr.rel target = $region3
    $region8: #{tpu_custom_call.1} parent=1 // loop_exit
      _
    %782 = vsyncpa [#allocation5], 1
    %s783 = scalar_lea.sflag [#allocation5], 1
    %784 = vsyncpa %s783, 1
    %785 = vsyncpa [#allocation8], 1
    %s786 = scalar_lea.sflag [#allocation8], 1
    %787 = vsyncpa %s786, 1
    %788 = vsyncpa [#allocation11], 1
    %s789 = scalar_lea.sflag [#allocation11], 1
    %790 = vsyncpa %s789, 1
    %791 = vsyncpa [#allocation6], 1
    %s792 = scalar_lea.sflag [#allocation6], 1
    %793 = vsyncpa %s792, 1

</llo_original>
